<compile_context>
chip_gen: v7x
topology: tpu7x:2x2x1
jax: 0.10.0
libtpu: 0.0.40
codegen_flags: <defaults>
</compile_context>

<pallas_src>
import functools
import math
import warnings

import jax
import jax.numpy as jnp
from jax import lax
from jax.experimental import pallas as pl
from jax.experimental.pallas import tpu as pltpu

_LANE = 128
_INV_SQRT2 = 1.0 / math.sqrt(2.0)


def _cdiv(a, b):
    return -(-a // b)


def _round_up(v, m):
    return _cdiv(v, m) * m


def _pad2d(a, rows, cols):
    pr, pc = rows - a.shape[0], cols - a.shape[1]
    if pr == 0 and pc == 0:
        return a
    return jnp.pad(a, ((0, pr), (0, pc)))


def _vmem_capacity_bytes():
    """Generation-aware VMEM capacity; conservative 64 MiB (v7x/TC) fallback."""
    try:
        cap = int(pltpu.get_tpu_info().vmem_capacity_bytes)
        if cap > 0:
            return cap
    except Exception:
        pass
    return 64 * 1024 * 1024


def _num_tensorcores():
    """Best-effort TensorCore count per chip (v7x has 2); 1 if unknown."""
    try:
        info = pltpu.get_tpu_info()
        for name in ("num_cores", "core_count", "num_tensorcores",
                     "tensorcores_per_chip"):
            v = getattr(info, name, None)
            if v is None:
                continue
            try:
                v = int(v)
            except (TypeError, ValueError):
                continue
            if v > 0:
                return v
    except Exception:
        pass
    return 1


def _classifier_kernel(x_ref, w1_ref, b1_ref, g_ref, beta_ref, w2_ref, b2_ref,
                       o_ref, *, inv_hidden, n_sub, sub_m, mxu_dtype):
    # x_ref:  (tm, in_p)     streaming row tile
    # w1_ref: (in_p, hid_p)  resident weight (constant index map)
    # b1/g/beta: (1, hid_p); w2_ref: (hid_p, out_p); b2_ref: (1, out_p)
    # o_ref:  (tm, out_p)
    w1 = w1_ref[...]
    w2 = w2_ref[...]
    if mxu_dtype is not None:
        w1 = w1.astype(mxu_dtype)
        w2 = w2.astype(mxu_dtype)
    b1 = b1_ref[...].astype(jnp.float32)
    g = g_ref[...].astype(jnp.float32)
    beta = beta_ref[...].astype(jnp.float32)
    b2 = b2_ref[...].astype(jnp.float32)

    def sub_tile(i, carry):
        # Sub-tiling: sub-tile i+1's MXU matmul overlaps sub-tile i's
        # VPU-heavy erf-GeLU / LayerNorm (different VLIW slots).
        r0 = i * sub_m
        if not isinstance(r0, int):
            r0 = pl.multiple_of(r0, sub_m)
        x = x_ref[pl.ds(r0, sub_m), :]
        if mxu_dtype is not None:
            x = x.astype(mxu_dtype)

        # Linear 1 (MXU, f32 accumulate) + bias.
        h = jnp.dot(x, w1, preferred_element_type=jnp.float32) + b1

        # Exact erf GeLU (matches the PyTorch module), in f32.
        h = h * 0.5 * (1.0 + lax.erf(h * _INV_SQRT2))

        # BertLayerNorm (eps=1e-12, biased variance) over the *real* hid_dim.
        # Padded hidden lanes are exactly zero (zero W1 columns / b1 / gamma /
        # beta), so they contribute nothing to the sums and dividing by the
        # real hid_dim keeps the statistics exact.  One-pass E[h^2]-mu^2 saves
        # a serialized cross-lane reduction; post-GeLU activations keep
        # |mu| ~ sigma, so the f32 cancellation risk is negligible (and clamped
        # at zero).
        s = jnp.sum(h, axis=-1, keepdims=True)
        s2 = jnp.sum(h * h, axis=-1, keepdims=True)
        mu = s * inv_hidden
        var = jnp.maximum(s2 * inv_hidden - mu * mu, 0.0)
        hn = (h - mu) * lax.rsqrt(var + 1e-12)
        hn = hn * g + beta

        # Linear 2 (MXU, f32 accumulate) + bias.
        out = jnp.dot(hn.astype(w2.dtype), w2,
                      preferred_element_type=jnp.float32) + b2

        # NOTE: rows of a ragged boundary block hold garbage here; Pallas masks
        # their writeback, so they never reach HBM.
        o_ref[pl.ds(r0, sub_m), :] = out.astype(o_ref.dtype)
        return carry

    if n_sub == 1:
        sub_tile(0, None)
    else:
        lax.fori_loop(0, n_sub, sub_tile, None, unroll=True)


def _prepare_params(params, *, cast_matmul_to_bf16=False):
    """Pad parameters to lane-dense (128-multiple) feature dims, once."""
    w1, b1, gamma, beta, w2, b2 = (jnp.asarray(p) for p in params)
    in_dim, hid_dim = w1.shape
    out_dim = w2.shape[1]
    in_p = _round_up(in_dim, _LANE)
    hid_p = _round_up(hid_dim, _LANE)
    out_p = _round_up(out_dim, _LANE)

    w_dtype = (jnp.bfloat16
               if (cast_matmul_to_bf16 and w1.dtype == jnp.float32)
               else w1.dtype)
    padded = (
        _pad2d(w1.astype(w_dtype), in_p, hid_p),
        _pad2d(b1.reshape(1, -1), 1, hid_p),
        _pad2d(gamma.reshape(1, -1), 1, hid_p),
        _pad2d(beta.reshape(1, -1), 1, hid_p),
        _pad2d(w2.astype(w_dtype), hid_p, out_p),
        _pad2d(b2.reshape(1, -1), 1, out_p),
    )
    dims = (in_dim, hid_dim, out_dim, in_p, hid_p, out_p)
    return padded, dims


def _forward(hidden_states, padded_params, dims, *, tm, cast_matmul_to_bf16):
    w1_p, b1_p, g_p, beta_p, w2_p, b2_p = padded_params
    in_dim, hid_dim, out_dim, in_p, hid_p, out_p = dims
    assert hidden_states.shape[-1] == in_dim

    lead_shape = hidden_states.shape[:-1]
    x2d = hidden_states.reshape(-1, in_dim)
    n_rows = x2d.shape[0]
    if n_rows == 0:
        return jnp.zeros((*lead_shape, out_dim), hidden_states.dtype)

    # Pad only the feature axis when needed; the row axis uses a cdiv grid with
    # masked boundary-block reads/writes (no activation HBM round trip).
    if in_p != in_dim:
        x2d = jnp.pad(x2d, ((0, 0), (0, in_p - in_dim)))

    x_itemsize = x2d.dtype.itemsize
    w_itemsize = w1_p.dtype.itemsize
    row_align = {4: 8, 2: 16, 1: 32}.get(x_itemsize, 8)

    w_bytes = ((w1_p.size + w2_p.size) * w_itemsize
               + (b1_p.size + g_p.size + beta_p.size + b2_p.size)
               * b1_p.dtype.itemsize)

    def vmem_need(tm_e):
        x_tile = tm_e * in_p * x_itemsize      # double-buffered streaming input
        o_tile = tm_e * out_p * x_itemsize     # double-buffered output
        interm = 3 * tm_e * hid_p * 4          # f32 h / hn / temporaries
        return 2 * x_tile + 2 * o_tile + w_bytes + interm

    # Generation-aware VMEM budget (~75% of capacity: ~96 MiB on v5e/v6e,
    # ~48 MiB per TC on v7x).
    vmem_cap = _vmem_capacity_bytes()
    budget = int(0.75 * vmem_cap)

    tm_eff = max(row_align,
                 min(_round_up(tm, row_align), _round_up(n_rows, row_align)))
    while tm_eff > row_align and vmem_need(tm_eff) > budget:
        tm_eff = max(row_align, _round_up(tm_eff // 2, row_align))
    # TODO(synk): if the resident weights alone approach ~half the budget (very
    # large in/hid dims on v7x's 64 MiB VMEM), a K-tiled grid axis with a
    # pl.when-guarded f32 accumulator (and/or bf16 weights) is needed instead
    # of only shrinking the row tile; not implemented here.

    # v7x has 2 TensorCores per chip; keep at least one grid step per core so
    # the single "parallel" row axis feeds both cores.
    num_tc = _num_tensorcores()
    if num_tc > 1 and n_rows > num_tc * row_align:
        tm_eff = min(tm_eff,
                     max(row_align, _round_up(_cdiv(n_rows, num_tc), row_align)))

    grid = (_cdiv(n_rows, tm_eff),)

    # In-kernel sub-tiling for MXU/VPU overlap across sub-tiles.
    sub_m = tm_eff
    for cand in (256, 128):
        if tm_eff > cand and tm_eff % cand == 0:
            sub_m = cand
            break
    n_sub = tm_eff // sub_m

    mxu_dtype = (jnp.bfloat16
                 if (cast_matmul_to_bf16 and x2d.dtype == jnp.float32)
                 else None)

    kernel = functools.partial(
        _classifier_kernel, inv_hidden=1.0 / hid_dim,
        n_sub=n_sub, sub_m=sub_m, mxu_dtype=mxu_dtype)

    vmem_limit = min(max(32 * 1024 * 1024, int(1.25 * vmem_need(tm_eff))),
                     vmem_cap)
    cost = pl.CostEstimate(
        flops=2 * grid[0] * tm_eff * (in_p * hid_p + hid_p * out_p),
        transcendentals=grid[0] * tm_eff * hid_p,            # erf
        bytes_accessed=(n_rows * in_p * x_itemsize
                        + n_rows * out_p * x_itemsize + w_bytes),
    )

    def build(single_buffer_weights):
        def const_spec(shape):
            # Constant index_map -> DMA'd once; single-buffer to halve the
            # resident-weight VMEM footprint.
            if single_buffer_weights:
                return pl.BlockSpec(shape, lambda i: (0, 0),
                                    pipeline_mode=pl.Buffered(1))
            return pl.BlockSpec(shape, lambda i: (0, 0))

        return pl.pallas_call(
            kernel,
            out_shape=jax.ShapeDtypeStruct((n_rows, out_p),
                                           hidden_states.dtype),
            grid_spec=pltpu.PrefetchScalarGridSpec(
                num_scalar_prefetch=0,
                grid=grid,
                in_specs=[
                    pl.BlockSpec((tm_eff, in_p), lambda i: (i, 0)),  # x rows
                    const_spec((in_p, hid_p)),                       # W1
                    const_spec((1, hid_p)),                          # b1
                    const_spec((1, hid_p)),                          # gamma
                    const_spec((1, hid_p)),                          # beta
                    const_spec((hid_p, out_p)),                      # W2
                    const_spec((1, out_p)),                          # b2
                ],
                out_specs=pl.BlockSpec((tm_eff, out_p), lambda i: (i, 0)),
            ),
            compiler_params=pltpu.CompilerParams(
                dimension_semantics=("parallel",),
                vmem_limit_bytes=vmem_limit),
            cost_estimate=cost,
        )

    args = (x2d, w1_p, b1_p, g_p, beta_p, w2_p, b2_p)
    try:
        y = build(True)(*args)
    except Exception as e:  # log + fall back, do not silently swallow
        warnings.warn(
            "Single-buffered (pl.Buffered(1)) weight specs were rejected "
            f"({type(e).__name__}: {e}); retrying with default double-buffered "
            "weights.")
        y = build(False)(*args)

    out = y[:, :out_dim] if out_p != out_dim else y
    return out.reshape(*lead_shape, out_dim)


def make_simple_classifier(params, *, tm=1024, cast_matmul_to_bf16=False):
    """Pad/stage parameters once; returns hidden_states -> logits."""
    padded, dims = _prepare_params(params,
                                   cast_matmul_to_bf16=cast_matmul_to_bf16)
    return functools.partial(_forward, padded_params=padded, dims=dims,
                             tm=tm, cast_matmul_to_bf16=cast_matmul_to_bf16)


def simple_classifier(hidden_states, params, *, tm=1024,
                      cast_matmul_to_bf16=False):
    """One-shot convenience wrapper (prefer make_simple_classifier to hoist pads)."""
    return make_simple_classifier(
        params, tm=tm, cast_matmul_to_bf16=cast_matmul_to_bf16)(hidden_states)


def init_params(key, in_dim, hid_dim, out_dim, dtype=jnp.float32):
    k1, k2, k3, k4 = jax.random.split(key, 4)
    w1 = jax.random.normal(k1, (in_dim, hid_dim), dtype) * 0.02
    b1 = jax.random.normal(k2, (1, hid_dim), dtype) * 0.02
    gamma = jnp.ones((1, hid_dim), dtype)   # BertLayerNorm weight init
    beta = jnp.zeros((1, hid_dim), dtype)   # BertLayerNorm bias init
    w2 = jax.random.normal(k3, (hid_dim, out_dim), dtype) * 0.02
    b2 = jax.random.normal(k4, (1, out_dim), dtype) * 0.02
    return (w1, b1, gamma, beta, w2, b2)


def _reference(hidden_states, params):
    """Pure-JAX reference (matches the PyTorch module)."""
    w1, b1, gamma, beta, w2, b2 = params
    h = hidden_states @ w1 + b1
    h = h * 0.5 * (1.0 + lax.erf(h / jnp.sqrt(2.0)))
    mu = jnp.mean(h, axis=-1, keepdims=True)
    var = jnp.mean((h - mu) ** 2, axis=-1, keepdims=True)
    hn = (h - mu) / jnp.sqrt(var + 1e-12)
    hn = hn * gamma + beta
    return hn @ w2 + b2


if __name__ == "__main__":
    in_dim, hid_dim, out_dim = 32, 32, 16
    key = jax.random.PRNGKey(0)
    kx, kp = jax.random.split(key)
    params = init_params(kp, in_dim, hid_dim, out_dim)

    # Pad/stage weights once (hoisted out of the per-call path).
    classifier = make_simple_classifier(params)

    # Case 1: (batch, seq) = (2, 8).
    x1 = jax.random.normal(kx, (2, 8, in_dim), jnp.float32)
    out1 = jax.block_until_ready(classifier(x1))
    ref1 = _reference(x1, params)
    assert out1.shape == (2, 8, out_dim)
    assert jnp.allclose(out1, ref1, atol=2e-5, rtol=2e-5)

    # Case 2: ragged row count (15 rows) exercises the masked boundary block.
    x2 = jax.random.normal(kx, (3, 5, in_dim), jnp.float32)
    out2 = jax.block_until_ready(classifier(x2))
    ref2 = _reference(x2, params)
    assert out2.shape == (3, 5, out_dim)
    assert jnp.allclose(out2, ref2, atol=2e-5, rtol=2e-5)

    print("KERNEL_OK")
</pallas_src>

<mosaic_0001>
module attributes {stable_mosaic.version = 11 : i64} {
  func.func @_classifier_kernel(%arg0: i32, %arg1: memref<16x128xf32, #tpu.memory_space<vmem>>, %arg2: memref<128x128xf32, #tpu.memory_space<vmem>>, %arg3: memref<1x128xf32, #tpu.memory_space<vmem>>, %arg4: memref<1x128xf32, #tpu.memory_space<vmem>>, %arg5: memref<1x128xf32, #tpu.memory_space<vmem>>, %arg6: memref<128x128xf32, #tpu.memory_space<vmem>>, %arg7: memref<1x128xf32, #tpu.memory_space<vmem>>, %arg8: memref<16x128xf32, #tpu.memory_space<vmem>>) attributes {dimension_semantics = [#tpu.dimension_semantics<parallel>], iteration_bounds = array<i64: 1>, scalar_prefetch = 0 : i64, scratch_operands = 0 : i64, tpu.core_type = #tpu.core_type<tc>, window_params = [{transform_indices = @transform_0, window_bounds = array<i64: 16, 128>}, {pipeline_mode = #tpu.pipeline_mode<synchronous>, transform_indices = @transform_1, window_bounds = array<i64: 128, 128>}, {pipeline_mode = #tpu.pipeline_mode<synchronous>, transform_indices = @transform_2, window_bounds = array<i64: 1, 128>}, {pipeline_mode = #tpu.pipeline_mode<synchronous>, transform_indices = @transform_3, window_bounds = array<i64: 1, 128>}, {pipeline_mode = #tpu.pipeline_mode<synchronous>, transform_indices = @transform_4, window_bounds = array<i64: 1, 128>}, {pipeline_mode = #tpu.pipeline_mode<synchronous>, transform_indices = @transform_5, window_bounds = array<i64: 128, 128>}, {pipeline_mode = #tpu.pipeline_mode<synchronous>, transform_indices = @transform_6, window_bounds = array<i64: 1, 128>}, {transform_indices = @transform_7, window_bounds = array<i64: 16, 128>}]} {
    %c0 = arith.constant 0 : index
    %c0_0 = arith.constant 0 : index
    %0 = vector.load %arg2[%c0, %c0_0] : memref<128x128xf32, #tpu.memory_space<vmem>>, vector<128x128xf32>
    %c0_1 = arith.constant 0 : index
    %c0_2 = arith.constant 0 : index
    %1 = vector.load %arg6[%c0_1, %c0_2] : memref<128x128xf32, #tpu.memory_space<vmem>>, vector<128x128xf32>
    %c0_3 = arith.constant 0 : index
    %c0_4 = arith.constant 0 : index
    %2 = vector.load %arg3[%c0_3, %c0_4] : memref<1x128xf32, #tpu.memory_space<vmem>>, vector<1x128xf32>
    %c0_5 = arith.constant 0 : index
    %c0_6 = arith.constant 0 : index
    %3 = vector.load %arg4[%c0_5, %c0_6] : memref<1x128xf32, #tpu.memory_space<vmem>>, vector<1x128xf32>
    %c0_7 = arith.constant 0 : index
    %c0_8 = arith.constant 0 : index
    %4 = vector.load %arg5[%c0_7, %c0_8] : memref<1x128xf32, #tpu.memory_space<vmem>>, vector<1x128xf32>
    %c0_9 = arith.constant 0 : index
    %c0_10 = arith.constant 0 : index
    %5 = vector.load %arg7[%c0_9, %c0_10] : memref<1x128xf32, #tpu.memory_space<vmem>>, vector<1x128xf32>
    %c0_11 = arith.constant 0 : index
    %c0_12 = arith.constant 0 : index
    %6 = vector.load %arg1[%c0_11, %c0_12] : memref<16x128xf32, #tpu.memory_space<vmem>>, vector<16x128xf32>
    %cst = arith.constant dense<0.000000e+00> : vector<16x128xf32>
    %7 = tpu.matmul %6, %0, %cst {dimension_numbers = #tpu.dot_dimension_numbers<[1], [0], [0], [1], [0, 0, 1, 1], [], []>} : vector<16x128xf32>, vector<128x128xf32>, vector<16x128xf32> -> vector<16x128xf32>
    %8 = vector.broadcast %2 : vector<1x128xf32> to vector<16x128xf32>
    %9 = arith.addf %7, %8 : vector<16x128xf32>
    %cst_13 = arith.constant 5.000000e-01 : f32
    %10 = vector.broadcast %cst_13 : f32 to vector<16x128xf32>
    %11 = arith.mulf %9, %10 : vector<16x128xf32>
    %cst_14 = arith.constant 0.707106769 : f32
    %12 = vector.broadcast %cst_14 : f32 to vector<16x128xf32>
    %13 = arith.mulf %9, %12 : vector<16x128xf32>
    %14 = math.erf %13 : vector<16x128xf32>
    %cst_15 = arith.constant 1.000000e+00 : f32
    %15 = vector.broadcast %cst_15 : f32 to vector<16x128xf32>
    %16 = arith.addf %15, %14 : vector<16x128xf32>
    %17 = arith.mulf %11, %16 : vector<16x128xf32>
    %cst_16 = arith.constant dense<0.000000e+00> : vector<16xf32>
    %18 = vector.multi_reduction <add>, %17, %cst_16 [1] : vector<16x128xf32> to vector<16xf32>
    %19 = vector.shape_cast %18 : vector<16xf32> to vector<16x1xf32>
    %20 = arith.mulf %17, %17 : vector<16x128xf32>
    %cst_17 = arith.constant dense<0.000000e+00> : vector<16xf32>
    %21 = vector.multi_reduction <add>, %20, %cst_17 [1] : vector<16x128xf32> to vector<16xf32>
    %22 = vector.shape_cast %21 : vector<16xf32> to vector<16x1xf32>
    %cst_18 = arith.constant 3.125000e-02 : f32
    %23 = vector.broadcast %cst_18 : f32 to vector<16x1xf32>
    %24 = arith.mulf %19, %23 : vector<16x1xf32>
    %cst_19 = arith.constant 3.125000e-02 : f32
    %25 = vector.broadcast %cst_19 : f32 to vector<16x1xf32>
    %26 = arith.mulf %22, %25 : vector<16x1xf32>
    %27 = arith.mulf %24, %24 : vector<16x1xf32>
    %28 = arith.subf %26, %27 : vector<16x1xf32>
    %cst_20 = arith.constant 0.000000e+00 : f32
    %29 = vector.broadcast %cst_20 : f32 to vector<16x1xf32>
    %30 = arith.maximumf %28, %29 : vector<16x1xf32>
    %31 = vector.broadcast %24 : vector<16x1xf32> to vector<16x128xf32>
    %32 = arith.subf %17, %31 : vector<16x128xf32>
    %cst_21 = arith.constant 9.99999996E-13 : f32
    %33 = vector.broadcast %cst_21 : f32 to vector<16x1xf32>
    %34 = arith.addf %30, %33 : vector<16x1xf32>
    %35 = math.rsqrt %34 : vector<16x1xf32>
    %36 = vector.broadcast %35 : vector<16x1xf32> to vector<16x128xf32>
    %37 = arith.mulf %32, %36 : vector<16x128xf32>
    %38 = vector.broadcast %3 : vector<1x128xf32> to vector<16x128xf32>
    %39 = arith.mulf %37, %38 : vector<16x128xf32>
    %40 = vector.broadcast %4 : vector<1x128xf32> to vector<16x128xf32>
    %41 = arith.addf %39, %40 : vector<16x128xf32>
    %cst_22 = arith.constant dense<0.000000e+00> : vector<16x128xf32>
    %42 = tpu.matmul %41, %1, %cst_22 {dimension_numbers = #tpu.dot_dimension_numbers<[1], [0], [0], [1], [0, 0, 1, 1], [], []>} : vector<16x128xf32>, vector<128x128xf32>, vector<16x128xf32> -> vector<16x128xf32>
    %43 = vector.broadcast %5 : vector<1x128xf32> to vector<16x128xf32>
    %44 = arith.addf %42, %43 : vector<16x128xf32>
    %c0_23 = arith.constant 0 : index
    %c0_24 = arith.constant 0 : index
    %45 = vector.load %arg8[%c0_23, %c0_24] : memref<16x128xf32, #tpu.memory_space<vmem>>, vector<16x128xf32>
    tpu.vector_store %arg8[%c0_23, %c0_24], %44 {strides = array<i32>} : memref<16x128xf32, #tpu.memory_space<vmem>>, vector<16x128xf32>,
    return
  }
  func.func @transform_0(%arg0: i32) -> (i32, i32) {
    %c0_i32 = arith.constant 0 : i32
    %c0_i32_0 = arith.constant 0 : i32
    return %arg0, %c0_i32 : i32, i32
  }
  func.func @transform_1(%arg0: i32) -> (i32, i32) {
    %c0_i32 = arith.constant 0 : i32
    %c0_i32_0 = arith.constant 0 : i32
    %c0_i32_1 = arith.constant 0 : i32
    return %c0_i32, %c0_i32_0 : i32, i32
  }
  func.func @transform_2(%arg0: i32) -> (i32, i32) {
    %c0_i32 = arith.constant 0 : i32
    %c0_i32_0 = arith.constant 0 : i32
    %c0_i32_1 = arith.constant 0 : i32
    return %c0_i32, %c0_i32_0 : i32, i32
  }
  func.func @transform_3(%arg0: i32) -> (i32, i32) {
    %c0_i32 = arith.constant 0 : i32
    %c0_i32_0 = arith.constant 0 : i32
    %c0_i32_1 = arith.constant 0 : i32
    return %c0_i32, %c0_i32_0 : i32, i32
  }
  func.func @transform_4(%arg0: i32) -> (i32, i32) {
    %c0_i32 = arith.constant 0 : i32
    %c0_i32_0 = arith.constant 0 : i32
    %c0_i32_1 = arith.constant 0 : i32
    return %c0_i32, %c0_i32_0 : i32, i32
  }
  func.func @transform_5(%arg0: i32) -> (i32, i32) {
    %c0_i32 = arith.constant 0 : i32
    %c0_i32_0 = arith.constant 0 : i32
    %c0_i32_1 = arith.constant 0 : i32
    return %c0_i32, %c0_i32_0 : i32, i32
  }
  func.func @transform_6(%arg0: i32) -> (i32, i32) {
    %c0_i32 = arith.constant 0 : i32
    %c0_i32_0 = arith.constant 0 : i32
    %c0_i32_1 = arith.constant 0 : i32
    return %c0_i32, %c0_i32_0 : i32, i32
  }
  func.func @transform_7(%arg0: i32) -> (i32, i32) {
    %c0_i32 = arith.constant 0 : i32
    %c0_i32_0 = arith.constant 0 : i32
    return %arg0, %c0_i32 : i32, i32
  }
}

module attributes {stable_mosaic.version = 11 : i64} {
  func.func @_classifier_kernel(%arg0: i32, %arg1: memref<16x128xf32, #tpu.memory_space<vmem>>, %arg2: memref<128x128xf32, #tpu.memory_space<vmem>>, %arg3: memref<1x128xf32, #tpu.memory_space<vmem>>, %arg4: memref<1x128xf32, #tpu.memory_space<vmem>>, %arg5: memref<1x128xf32, #tpu.memory_space<vmem>>, %arg6: memref<128x128xf32, #tpu.memory_space<vmem>>, %arg7: memref<1x128xf32, #tpu.memory_space<vmem>>, %arg8: memref<16x128xf32, #tpu.memory_space<vmem>>) attributes {dimension_semantics = [#tpu.dimension_semantics<parallel>], iteration_bounds = array<i64: 1>, scalar_prefetch = 0 : i64, scratch_operands = 0 : i64, tpu.core_type = #tpu.core_type<tc>, window_params = [{transform_indices = @transform_0, window_bounds = array<i64: 16, 128>}, {pipeline_mode = #tpu.pipeline_mode<synchronous>, transform_indices = @transform_1, window_bounds = array<i64: 128, 128>}, {pipeline_mode = #tpu.pipeline_mode<synchronous>, transform_indices = @transform_2, window_bounds = array<i64: 1, 128>}, {pipeline_mode = #tpu.pipeline_mode<synchronous>, transform_indices = @transform_3, window_bounds = array<i64: 1, 128>}, {pipeline_mode = #tpu.pipeline_mode<synchronous>, transform_indices = @transform_4, window_bounds = array<i64: 1, 128>}, {pipeline_mode = #tpu.pipeline_mode<synchronous>, transform_indices = @transform_5, window_bounds = array<i64: 128, 128>}, {pipeline_mode = #tpu.pipeline_mode<synchronous>, transform_indices = @transform_6, window_bounds = array<i64: 1, 128>}, {transform_indices = @transform_7, window_bounds = array<i64: 16, 128>}]} {
    %c0 = arith.constant 0 : index
    %c0_0 = arith.constant 0 : index
    %0 = vector.load %arg2[%c0, %c0_0] : memref<128x128xf32, #tpu.memory_space<vmem>>, vector<128x128xf32>
    %c0_1 = arith.constant 0 : index
    %c0_2 = arith.constant 0 : index
    %1 = vector.load %arg6[%c0_1, %c0_2] : memref<128x128xf32, #tpu.memory_space<vmem>>, vector<128x128xf32>
    %c0_3 = arith.constant 0 : index
    %c0_4 = arith.constant 0 : index
    %2 = vector.load %arg3[%c0_3, %c0_4] : memref<1x128xf32, #tpu.memory_space<vmem>>, vector<1x128xf32>
    %c0_5 = arith.constant 0 : index
    %c0_6 = arith.constant 0 : index
    %3 = vector.load %arg4[%c0_5, %c0_6] : memref<1x128xf32, #tpu.memory_space<vmem>>, vector<1x128xf32>
    %c0_7 = arith.constant 0 : index
    %c0_8 = arith.constant 0 : index
    %4 = vector.load %arg5[%c0_7, %c0_8] : memref<1x128xf32, #tpu.memory_space<vmem>>, vector<1x128xf32>
    %c0_9 = arith.constant 0 : index
    %c0_10 = arith.constant 0 : index
    %5 = vector.load %arg7[%c0_9, %c0_10] : memref<1x128xf32, #tpu.memory_space<vmem>>, vector<1x128xf32>
    %c0_11 = arith.constant 0 : index
    %c0_12 = arith.constant 0 : index
    %6 = vector.load %arg1[%c0_11, %c0_12] : memref<16x128xf32, #tpu.memory_space<vmem>>, vector<16x128xf32>
    %cst = arith.constant dense<0.000000e+00> : vector<16x128xf32>
    %7 = tpu.matmul %6, %0, %cst {dimension_numbers = #tpu.dot_dimension_numbers<[1], [0], [0], [1], [0, 0, 1, 1], [], []>} : vector<16x128xf32>, vector<128x128xf32>, vector<16x128xf32> -> vector<16x128xf32>
    %8 = vector.broadcast %2 : vector<1x128xf32> to vector<16x128xf32>
    %9 = arith.addf %7, %8 : vector<16x128xf32>
    %cst_13 = arith.constant 5.000000e-01 : f32
    %10 = vector.broadcast %cst_13 : f32 to vector<16x128xf32>
    %11 = arith.mulf %9, %10 : vector<16x128xf32>
    %cst_14 = arith.constant 0.707106769 : f32
    %12 = vector.broadcast %cst_14 : f32 to vector<16x128xf32>
    %13 = arith.mulf %9, %12 : vector<16x128xf32>
    %14 = math.erf %13 : vector<16x128xf32>
    %cst_15 = arith.constant 1.000000e+00 : f32
    %15 = vector.broadcast %cst_15 : f32 to vector<16x128xf32>
    %16 = arith.addf %15, %14 : vector<16x128xf32>
    %17 = arith.mulf %11, %16 : vector<16x128xf32>
    %cst_16 = arith.constant dense<0.000000e+00> : vector<16xf32>
    %18 = vector.multi_reduction <add>, %17, %cst_16 [1] : vector<16x128xf32> to vector<16xf32>
    %19 = vector.shape_cast %18 : vector<16xf32> to vector<16x1xf32>
    %20 = arith.mulf %17, %17 : vector<16x128xf32>
    %cst_17 = arith.constant dense<0.000000e+00> : vector<16xf32>
    %21 = vector.multi_reduction <add>, %20, %cst_17 [1] : vector<16x128xf32> to vector<16xf32>
    %22 = vector.shape_cast %21 : vector<16xf32> to vector<16x1xf32>
    %cst_18 = arith.constant 3.125000e-02 : f32
    %23 = vector.broadcast %cst_18 : f32 to vector<16x1xf32>
    %24 = arith.mulf %19, %23 : vector<16x1xf32>
    %cst_19 = arith.constant 3.125000e-02 : f32
    %25 = vector.broadcast %cst_19 : f32 to vector<16x1xf32>
    %26 = arith.mulf %22, %25 : vector<16x1xf32>
    %27 = arith.mulf %24, %24 : vector<16x1xf32>
    %28 = arith.subf %26, %27 : vector<16x1xf32>
    %cst_20 = arith.constant 0.000000e+00 : f32
    %29 = vector.broadcast %cst_20 : f32 to vector<16x1xf32>
    %30 = arith.maximumf %28, %29 : vector<16x1xf32>
    %31 = vector.broadcast %24 : vector<16x1xf32> to vector<16x128xf32>
    %32 = arith.subf %17, %31 : vector<16x128xf32>
    %cst_21 = arith.constant 9.99999996E-13 : f32
    %33 = vector.broadcast %cst_21 : f32 to vector<16x1xf32>
    %34 = arith.addf %30, %33 : vector<16x1xf32>
    %35 = math.rsqrt %34 : vector<16x1xf32>
    %36 = vector.broadcast %35 : vector<16x1xf32> to vector<16x128xf32>
    %37 = arith.mulf %32, %36 : vector<16x128xf32>
    %38 = vector.broadcast %3 : vector<1x128xf32> to vector<16x128xf32>
    %39 = arith.mulf %37, %38 : vector<16x128xf32>
    %40 = vector.broadcast %4 : vector<1x128xf32> to vector<16x128xf32>
    %41 = arith.addf %39, %40 : vector<16x128xf32>
    %cst_22 = arith.constant dense<0.000000e+00> : vector<16x128xf32>
    %42 = tpu.matmul %41, %1, %cst_22 {dimension_numbers = #tpu.dot_dimension_numbers<[1], [0], [0], [1], [0, 0, 1, 1], [], []>} : vector<16x128xf32>, vector<128x128xf32>, vector<16x128xf32> -> vector<16x128xf32>
    %43 = vector.broadcast %5 : vector<1x128xf32> to vector<16x128xf32>
    %44 = arith.addf %42, %43 : vector<16x128xf32>
    %c0_23 = arith.constant 0 : index
    %c0_24 = arith.constant 0 : index
    %45 = vector.load %arg8[%c0_23, %c0_24] : memref<16x128xf32, #tpu.memory_space<vmem>>, vector<16x128xf32>
    tpu.vector_store %arg8[%c0_23, %c0_24], %44 {strides = array<i32>} : memref<16x128xf32, #tpu.memory_space<vmem>>, vector<16x128xf32>,
    return
  }
  func.func @transform_0(%arg0: i32) -> (i32, i32) {
    %c0_i32 = arith.constant 0 : i32
    %c0_i32_0 = arith.constant 0 : i32
    return %arg0, %c0_i32 : i32, i32
  }
  func.func @transform_1(%arg0: i32) -> (i32, i32) {
    %c0_i32 = arith.constant 0 : i32
    %c0_i32_0 = arith.constant 0 : i32
    %c0_i32_1 = arith.constant 0 : i32
    return %c0_i32, %c0_i32_0 : i32, i32
  }
  func.func @transform_2(%arg0: i32) -> (i32, i32) {
    %c0_i32 = arith.constant 0 : i32
    %c0_i32_0 = arith.constant 0 : i32
    %c0_i32_1 = arith.constant 0 : i32
    return %c0_i32, %c0_i32_0 : i32, i32
  }
  func.func @transform_3(%arg0: i32) -> (i32, i32) {
    %c0_i32 = arith.constant 0 : i32
    %c0_i32_0 = arith.constant 0 : i32
    %c0_i32_1 = arith.constant 0 : i32
    return %c0_i32, %c0_i32_0 : i32, i32
  }
  func.func @transform_4(%arg0: i32) -> (i32, i32) {
    %c0_i32 = arith.constant 0 : i32
    %c0_i32_0 = arith.constant 0 : i32
    %c0_i32_1 = arith.constant 0 : i32
    return %c0_i32, %c0_i32_0 : i32, i32
  }
  func.func @transform_5(%arg0: i32) -> (i32, i32) {
    %c0_i32 = arith.constant 0 : i32
    %c0_i32_0 = arith.constant 0 : i32
    %c0_i32_1 = arith.constant 0 : i32
    return %c0_i32, %c0_i32_0 : i32, i32
  }
  func.func @transform_6(%arg0: i32) -> (i32, i32) {
    %c0_i32 = arith.constant 0 : i32
    %c0_i32_0 = arith.constant 0 : i32
    %c0_i32_1 = arith.constant 0 : i32
    return %c0_i32, %c0_i32_0 : i32, i32
  }
  func.func @transform_7(%arg0: i32) -> (i32, i32) {
    %c0_i32 = arith.constant 0 : i32
    %c0_i32_0 = arith.constant 0 : i32
    return %arg0, %c0_i32 : i32, i32
  }
}

</mosaic_0001>

<llo_original>
// kernel: tpu_custom_call.1
$region0: #{tpu_custom_call.1}
  #allocation0 [shape = 'u32[]', space=smem, size = 0x4, offset = 0x4, fixed_abs, tag = 'smem constant byte address 0x4 - core index']
  #allocation1 [shape = 'u32[144,128]{1,0:T(1,128)}', space=vmem, size = 0x12000, scoped, tag = 'internal scratch']
  %s0 = inlined_call_operand.hbm [shape: f32[16,128], index: 0, kind: input, shape index: {}]
  %s1 = inlined_call_operand.hbm [shape: f32[128,128], index: 1, kind: input, shape index: {}]
  %s2 = inlined_call_operand.vmem [shape: f32[1,128], index: 2, kind: input, shape index: {}]
  %s3 = inlined_call_operand.vmem [shape: f32[1,128], index: 3, kind: input, shape index: {}]
  %s4 = inlined_call_operand.vmem [shape: f32[1,128], index: 4, kind: input, shape index: {}]
  %s5 = inlined_call_operand.hbm [shape: f32[128,128], index: 5, kind: input, shape index: {}]
  %s6 = inlined_call_operand.vmem [shape: f32[1,128], index: 6, kind: input, shape index: {}]
  %s7 = inlined_call_operand.hbm [shape: f32[16,128], index: 7, kind: output, shape index: {}]
  %s8 = sld [smem:[#allocation0]]
  $region50: #{tpu_custom_call.1} parent=0
    _
  %s10 = ssub.s32 1, %s8
  %s11 = scalar_select 0, %s10, %s8
  $region1: #{tpu_custom_call.1} parent=0
    #allocation2 [shape = 'u8[8192]{0}', space=vmem, size = 0x2000, scoped, tag = 'input window, operand 0, single buffered']
    #allocation3 [shape = 's32[1]{0}', space=sflag, size = 0x4, scoped, tag = 'scoped memory for tpu_custom_call.1']
    #allocation4 [shape = 's32[1]{0}', space=sflag, size = 0x4, scoped, tag = 'scoped memory for tpu_custom_call.1']
    #allocation5 [shape = 'u8[65536]{0}', space=vmem, size = 0x10000, scoped, tag = 'input window, operand 1, single buffered']
    #allocation6 [shape = 's32[1]{0}', space=sflag, size = 0x4, scoped, tag = 'scoped memory for tpu_custom_call.1']
    #allocation7 [shape = 'u8[65536]{0}', space=vmem, size = 0x10000, scoped, tag = 'input window, operand 5, single buffered']
    #allocation8 [shape = 'u8[8192]{0}', space=vmem, size = 0x2000, scoped, tag = 'output window, operand 0, single buffered']
    %12 = vsyncpa [#allocation3], 0
    %13 = vsyncpa [#allocation6], 0
    %14 = vsyncpa [#allocation4], 0
    // Predicated region
    $region2: #{tpu_custom_call.1} parent=1 // pred_check
      _
    $region3: #{tpu_custom_call.1} parent=1 // pred_check_branch
      %16 = sbr.rel (0) target = $region5
    $region4: #{tpu_custom_call.1} parent=1 // pred_region
      %s18 = ssub.s32 256, 256
      %19 = vsyncadd [#allocation3], %s18
      %s20 = sshll.u32 [#allocation2], 4
      %s21 = int_to_ptr.vmem [resolvable:$true] %s20
      %26 = dma.hbm_to_vmem [thread:$0]  %s0, 256, %s21, [#allocation3], 128, 128, 8
    $region5: #{tpu_custom_call.1} parent=1 // pred_fallthru
      _
    // Predicated region
    $region6: #{tpu_custom_call.1} parent=1 // pred_check
      _
    $region7: #{tpu_custom_call.1} parent=1 // pred_check_branch
      %28 = sbr.rel (0) target = $region9
    $region8: #{tpu_custom_call.1} parent=1 // pred_region
      %s30 = ssub.s32 2048, 2048
      %31 = vsyncadd [#allocation6], %s30
      %s32 = sshll.u32 [#allocation5], 4
      %s33 = int_to_ptr.vmem [resolvable:$true] %s32
      %38 = dma.hbm_to_vmem [thread:$0]  %s1, 2048, %s33, [#allocation6], 128, 128, 8
    $region9: #{tpu_custom_call.1} parent=1 // pred_fallthru
      _
    // Predicated region
    $region10: #{tpu_custom_call.1} parent=1 // pred_check
      _
    $region11: #{tpu_custom_call.1} parent=1 // pred_check_branch
      %40 = sbr.rel (0) target = $region13
    $region12: #{tpu_custom_call.1} parent=1 // pred_region
      _
    $region13: #{tpu_custom_call.1} parent=1 // pred_fallthru
      _
    // Predicated region
    $region14: #{tpu_custom_call.1} parent=1 // pred_check
      _
    $region15: #{tpu_custom_call.1} parent=1 // pred_check_branch
      %42 = sbr.rel (0) target = $region17
    $region16: #{tpu_custom_call.1} parent=1 // pred_region
      _
    $region17: #{tpu_custom_call.1} parent=1 // pred_fallthru
      _
    // Predicated region
    $region18: #{tpu_custom_call.1} parent=1 // pred_check
      _
    $region19: #{tpu_custom_call.1} parent=1 // pred_check_branch
      %44 = sbr.rel (0) target = $region21
    $region20: #{tpu_custom_call.1} parent=1 // pred_region
      _
    $region21: #{tpu_custom_call.1} parent=1 // pred_fallthru
      _
    // Predicated region
    $region22: #{tpu_custom_call.1} parent=1 // pred_check
      _
    $region23: #{tpu_custom_call.1} parent=1 // pred_check_branch
      %46 = sbr.rel (0) target = $region25
    $region24: #{tpu_custom_call.1} parent=1 // pred_region
      %s48 = ssub.s32 2048, 2048
      %49 = vsyncadd [#allocation6], %s48
      %s50 = sshll.u32 [#allocation7], 4
      %s51 = int_to_ptr.vmem [resolvable:$true] %s50
      %56 = dma.hbm_to_vmem [thread:$0]  %s5, 2048, %s51, [#allocation6], 128, 128, 8
    $region25: #{tpu_custom_call.1} parent=1 // pred_fallthru
      _
    // Predicated region
    $region26: #{tpu_custom_call.1} parent=1 // pred_check
      _
    $region27: #{tpu_custom_call.1} parent=1 // pred_check_branch
      %58 = sbr.rel (0) target = $region29
    $region28: #{tpu_custom_call.1} parent=1 // pred_region
      _
    $region29: #{tpu_custom_call.1} parent=1 // pred_fallthru
      _
    // Predicated region
    $region30: #{tpu_custom_call.1} parent=1 // pred_check
      _
    $region31: #{tpu_custom_call.1} parent=1 // pred_check_branch
      %60 = sbr.rel (0) target = $region33
    $region32: #{tpu_custom_call.1} parent=1 // pred_region
      %61 = dma.done [#allocation3], 256
    $region33: #{tpu_custom_call.1} parent=1 // pred_fallthru
      _
    // Predicated region
    $region34: #{tpu_custom_call.1} parent=1 // pred_check
      _
    $region35: #{tpu_custom_call.1} parent=1 // pred_check_branch
      %63 = sbr.rel (0) target = $region37
    $region36: #{tpu_custom_call.1} parent=1 // pred_region
      %64 = dma.done [#allocation6], 2048
    $region37: #{tpu_custom_call.1} parent=1 // pred_fallthru
      _
    // Predicated region
    $region38: #{tpu_custom_call.1} parent=1 // pred_check
      _
    $region39: #{tpu_custom_call.1} parent=1 // pred_check_branch
      %66 = sbr.rel (0) target = $region41
    $region40: #{tpu_custom_call.1} parent=1 // pred_region
      %67 = dma.done [#allocation6], 2048
    $region41: #{tpu_custom_call.1} parent=1 // pred_fallthru
      _
    %v68 = vld [vmem:[#allocation5] sm:$0xff]
    %v69 = vld [vmem:[#allocation5 + $0x8] sm:$0xff]
    %v70 = vld [vmem:[#allocation5 + $0x10] sm:$0xff]
    %v71 = vld [vmem:[#allocation5 + $0x18] sm:$0xff]
    %v72 = vld [vmem:[#allocation5 + $0x20] sm:$0xff]
    %v73 = vld [vmem:[#allocation5 + $0x28] sm:$0xff]
    %v74 = vld [vmem:[#allocation5 + $0x30] sm:$0xff]
    %v75 = vld [vmem:[#allocation5 + $0x38] sm:$0xff]
    %v76 = vld [vmem:[#allocation5 + $0x40] sm:$0xff]
    %v77 = vld [vmem:[#allocation5 + $0x48] sm:$0xff]
    %v78 = vld [vmem:[#allocation5 + $0x50] sm:$0xff]
    %v79 = vld [vmem:[#allocation5 + $0x58] sm:$0xff]
    %v80 = vld [vmem:[#allocation5 + $0x60] sm:$0xff]
    %v81 = vld [vmem:[#allocation5 + $0x68] sm:$0xff]
    %v82 = vld [vmem:[#allocation5 + $0x70] sm:$0xff]
    %v83 = vld [vmem:[#allocation5 + $0x78] sm:$0xff]
    %v84 = vld [vmem:[#allocation7] sm:$0xff]
    %v85 = vld [vmem:[#allocation7 + $0x8] sm:$0xff]
    %v86 = vld [vmem:[#allocation7 + $0x10] sm:$0xff]
    %v87 = vld [vmem:[#allocation7 + $0x18] sm:$0xff]
    %v88 = vld [vmem:[#allocation7 + $0x20] sm:$0xff]
    %v89 = vld [vmem:[#allocation7 + $0x28] sm:$0xff]
    %v90 = vld [vmem:[#allocation7 + $0x30] sm:$0xff]
    %v91 = vld [vmem:[#allocation7 + $0x38] sm:$0xff]
    %v92 = vld [vmem:[#allocation7 + $0x40] sm:$0xff]
    %v93 = vld [vmem:[#allocation7 + $0x48] sm:$0xff]
    %v94 = vld [vmem:[#allocation7 + $0x50] sm:$0xff]
    %v95 = vld [vmem:[#allocation7 + $0x58] sm:$0xff]
    %v96 = vld [vmem:[#allocation7 + $0x60] sm:$0xff]
    %v97 = vld [vmem:[#allocation7 + $0x68] sm:$0xff]
    %v98 = vld [vmem:[#allocation7 + $0x70] sm:$0xff]
    %v99 = vld [vmem:[#allocation7 + $0x78] sm:$0xff]
    %v100 = vld [vmem:[%s2] sm:$0x1]
    %v101 = vld [vmem:[%s3] sm:$0x1]
    %v102 = vld [vmem:[%s4] sm:$0x1]
    %v103 = vld [vmem:[%s6] sm:$0x1]
    %v104 = vld [vmem:[#allocation2] sm:$0xff]
    %v105 = vld [vmem:[#allocation2 + $0x8] sm:$0xff]
    %v107 = vlaneseq
    %v108 = vshrl.u32 %v107, 7
    %v109 = vsub.s32 0, %v108
    %v110 = vrot.slane %v100, %v109
    %112 = vmatprep.subr.mxu0 0.0
    %113 = vmatpush1.msra.mxu0 %v68
    %114 = vmatprep.subr.mxu0 0.0
    %115 = vmatpush1.msra.mxu0 %v69
    %116 = vmatprep.subr.mxu0 0.0
    %117 = vmatpush1.msra.mxu0 %v70
    %118 = vmatprep.subr.mxu0 0.0
    %119 = vmatpush1.msra.mxu0 %v71
    %120 = vmatprep.subr.mxu0 0.0
    %121 = vmatpush1.msra.mxu0 %v72
    %122 = vmatprep.subr.mxu0 0.0
    %123 = vmatpush1.msra.mxu0 %v73
    %124 = vmatprep.subr.mxu0 0.0
    %125 = vmatpush1.msra.mxu0 %v74
    %126 = vmatprep.subr.mxu0 0.0
    %127 = vmatpush1.msra.mxu0 %v75
    %128 = vmatprep.subr.mxu0 0.0
    %129 = vmatpush1.msra.mxu0 %v76
    %130 = vmatprep.subr.mxu0 0.0
    %131 = vmatpush1.msra.mxu0 %v77
    %132 = vmatprep.subr.mxu0 0.0
    %133 = vmatpush1.msra.mxu0 %v78
    %134 = vmatprep.subr.mxu0 0.0
    %135 = vmatpush1.msra.mxu0 %v79
    %136 = vmatprep.subr.mxu0 0.0
    %137 = vmatpush1.msra.mxu0 %v80
    %138 = vmatprep.subr.mxu0 0.0
    %139 = vmatpush1.msra.mxu0 %v81
    %140 = vmatprep.subr.mxu0 0.0
    %141 = vmatpush1.msra.mxu0 %v82
    %142 = vmatprep.subr.mxu0 0.0
    %143 = vmatpush1.msra.mxu0 %v83
    %144 = vmatprep.subr.mxu0 0.0
    %145 = vmatpush1.msra.mxu0 0.0
    %146 = vmatprep.subr.mxu0 0.0
    %147 = vmatpush1.msra.mxu0 0.0
    %148 = vmatprep.subr.mxu0 0.0
    %149 = vmatpush1.msra.mxu0 0.0
    %150 = vmatprep.subr.mxu0 0.0
    %151 = vmatpush1.msra.mxu0 0.0
    %152 = vmatprep.subr.mxu0 0.0
    %153 = vmatpush1.msra.mxu0 0.0
    %154 = vmatprep.subr.mxu0 0.0
    %155 = vmatpush1.msra.mxu0 0.0
    %156 = vmatprep.subr.mxu0 0.0
    %157 = vmatpush1.msra.mxu0 0.0
    %158 = vmatprep.subr.mxu0 0.0
    %159 = vmatpush1.msra.mxu0 0.0
    %160 = vmatprep.subr.mxu0 0.0
    %161 = vmatpush1.msra.mxu0 0.0
    %162 = vmatprep.subr.mxu0 0.0
    %163 = vmatpush1.msra.mxu0 0.0
    %164 = vmatprep.subr.mxu0 0.0
    %165 = vmatpush1.msra.mxu0 0.0
    %166 = vmatprep.subr.mxu0 0.0
    %167 = vmatpush1.msra.mxu0 0.0
    %168 = vmatprep.subr.mxu0 0.0
    %169 = vmatpush1.msra.mxu0 0.0
    %170 = vmatprep.subr.mxu0 0.0
    %171 = vmatpush1.msra.mxu0 0.0
    %172 = vmatprep.subr.mxu0 0.0
    %173 = vmatpush1.msra.mxu0 0.0
    %174 = vmatprep.subr.mxu0 0.0
    %175 = vmatpush1.msra.mxu0 0.0
    %176 = vmatprep.mubr.f32.mxu0 0.0
    %177 = vmatmul.mubr.f32.gmra.mrb[0].mxu0 %v104
    %v178 = vpop.f32.mrb[0].mxu0
    %v179 = vadd.f32 %v110, %v178
    %v180 = vpop.f32.mrb[0].mxu0
    %181 = vmatprep.mubr.f32.mxu0 0.0
    %182 = vmatmul.mubr.f32.gmra.mrb[0].mxu0 %v105
    %v183 = vpop.f32.mrb[0].mxu0
    %v184 = vadd.f32 %v110, %v183
    %v185 = vpop.f32.mrb[0].mxu0
    %186 = vdwg.mxu0
    %v187 = vmul.f32 %v179, 0.5
    %v188 = vmul.f32 %v184, 0.5
    %v189 = vmul.f32 %v179, 0.70710677
    %v190 = vmul.f32 %v184, 0.70710677
    %v191 = verf.f32.pop %v189
    %v192 = verf.f32.pop %v190
    %v193 = vadd.f32 %v191, 1.0
    %v194 = vadd.f32 %v192, 1.0
    %v195 = vmul.f32 %v187, %v193
    %v196 = vmul.f32 %v188, %v194
    %197 = vadd.xlane.f32.xlu0 %v195
    %v198 = vpop.xlane.xlu0 %197
    %199 = vadd.xlane.f32.xlu0 %v196
    %v200 = vpop.xlane.xlu0 %199
    %v201 = vmul.f32 %v195, %v195
    %v202 = vmul.f32 %v196, %v196
    %203 = vadd.xlane.f32.xlu0 %v201
    %v204 = vpop.xlane.xlu0 %203
    %205 = vadd.xlane.f32.xlu0 %v202
    %v206 = vpop.xlane.xlu0 %205
    %v207 = vmul.f32 %v198, 0.03125
    %v208 = vmul.f32 %v200, 0.03125
    %v209 = vmul.f32 %v204, 0.03125
    %v210 = vmul.f32 %v206, 0.03125
    %v211 = vmul.f32 %v207, %v207
    %v212 = vmul.f32 %v208, %v208
    %v213 = vsub.f32 %v209, %v211
    %v214 = vsub.f32 %v210, %v212
    %v215 = vmax.f32 %v213, 0.0
    %v216 = vmax.f32 %v214, 0.0
    %v217 = vsub.f32 %v195, %v207
    %v218 = vsub.f32 %v196, %v208
    %v219 = vadd.f32 %v215, 1e-12
    %v220 = vadd.f32 %v216, 1e-12
    %v221 = vrsqrt.pop %v219
    %v222 = vrsqrt.pop %v220
    %v223 = vmul.f32 %v217, %v221
    %v224 = vmul.f32 %v218, %v222
    %v226 = vlaneseq
    %v227 = vshrl.u32 %v226, 7
    %v228 = vsub.s32 0, %v227
    %v229 = vrot.slane %v101, %v228
    %v231 = vmul.f32 %v223, %v229
    %v232 = vmul.f32 %v224, %v229
    %v234 = vlaneseq
    %v235 = vshrl.u32 %v234, 7
    %v236 = vsub.s32 0, %v235
    %v237 = vrot.slane %v102, %v236
    %v239 = vadd.f32 %v231, %v237
    %v240 = vadd.f32 %v232, %v237
    %v242 = vlaneseq
    %v243 = vshrl.u32 %v242, 7
    %v244 = vsub.s32 0, %v243
    %v245 = vrot.slane %v103, %v244
    %247 = vmatprep.subr.mxu0 0.0
    %248 = vmatpush1.msra.mxu0 %v84
    %249 = vmatprep.subr.mxu0 0.0
    %250 = vmatpush1.msra.mxu0 %v85
    %251 = vmatprep.subr.mxu0 0.0
    %252 = vmatpush1.msra.mxu0 %v86
    %253 = vmatprep.subr.mxu0 0.0
    %254 = vmatpush1.msra.mxu0 %v87
    %255 = vmatprep.subr.mxu0 0.0
    %256 = vmatpush1.msra.mxu0 %v88
    %257 = vmatprep.subr.mxu0 0.0
    %258 = vmatpush1.msra.mxu0 %v89
    %259 = vmatprep.subr.mxu0 0.0
    %260 = vmatpush1.msra.mxu0 %v90
    %261 = vmatprep.subr.mxu0 0.0
    %262 = vmatpush1.msra.mxu0 %v91
    %263 = vmatprep.subr.mxu0 0.0
    %264 = vmatpush1.msra.mxu0 %v92
    %265 = vmatprep.subr.mxu0 0.0
    %266 = vmatpush1.msra.mxu0 %v93
    %267 = vmatprep.subr.mxu0 0.0
    %268 = vmatpush1.msra.mxu0 %v94
    %269 = vmatprep.subr.mxu0 0.0
    %270 = vmatpush1.msra.mxu0 %v95
    %271 = vmatprep.subr.mxu0 0.0
    %272 = vmatpush1.msra.mxu0 %v96
    %273 = vmatprep.subr.mxu0 0.0
    %274 = vmatpush1.msra.mxu0 %v97
    %275 = vmatprep.subr.mxu0 0.0
    %276 = vmatpush1.msra.mxu0 %v98
    %277 = vmatprep.subr.mxu0 0.0
    %278 = vmatpush1.msra.mxu0 %v99
    %279 = vmatprep.subr.mxu0 0.0
    %280 = vmatpush1.msra.mxu0 0.0
    %281 = vmatprep.subr.mxu0 0.0
    %282 = vmatpush1.msra.mxu0 0.0
    %283 = vmatprep.subr.mxu0 0.0
    %284 = vmatpush1.msra.mxu0 0.0
    %285 = vmatprep.subr.mxu0 0.0
    %286 = vmatpush1.msra.mxu0 0.0
    %287 = vmatprep.subr.mxu0 0.0
    %288 = vmatpush1.msra.mxu0 0.0
    %289 = vmatprep.subr.mxu0 0.0
    %290 = vmatpush1.msra.mxu0 0.0
    %291 = vmatprep.subr.mxu0 0.0
    %292 = vmatpush1.msra.mxu0 0.0
    %293 = vmatprep.subr.mxu0 0.0
    %294 = vmatpush1.msra.mxu0 0.0
    %295 = vmatprep.subr.mxu0 0.0
    %296 = vmatpush1.msra.mxu0 0.0
    %297 = vmatprep.subr.mxu0 0.0
    %298 = vmatpush1.msra.mxu0 0.0
    %299 = vmatprep.subr.mxu0 0.0
    %300 = vmatpush1.msra.mxu0 0.0
    %301 = vmatprep.subr.mxu0 0.0
    %302 = vmatpush1.msra.mxu0 0.0
    %303 = vmatprep.subr.mxu0 0.0
    %304 = vmatpush1.msra.mxu0 0.0
    %305 = vmatprep.subr.mxu0 0.0
    %306 = vmatpush1.msra.mxu0 0.0
    %307 = vmatprep.subr.mxu0 0.0
    %308 = vmatpush1.msra.mxu0 0.0
    %309 = vmatprep.subr.mxu0 0.0
    %310 = vmatpush1.msra.mxu0 0.0
    %311 = vmatprep.mubr.f32.mxu0 0.0
    %312 = vmatmul.mubr.f32.gmra.mrb[0].mxu0 %v239
    %v313 = vpop.f32.mrb[0].mxu0
    %v314 = vadd.f32 %v245, %v313
    %v315 = vpop.f32.mrb[0].mxu0
    %316 = vmatprep.mubr.f32.mxu0 0.0
    %317 = vmatmul.mubr.f32.gmra.mrb[0].mxu0 %v240
    %v318 = vpop.f32.mrb[0].mxu0
    %v319 = vadd.f32 %v245, %v318
    %v320 = vpop.f32.mrb[0].mxu0
    %321 = vdwg.mxu0
    %322 = vst [vmem:[#allocation8] sm:$0xff] %v314
    %323 = vst [vmem:[#allocation8 + $0x8] sm:$0xff] %v319
    // Predicated region
    $region42: #{tpu_custom_call.1} parent=1 // pred_check
      _
    $region43: #{tpu_custom_call.1} parent=1 // pred_check_branch
      %325 = sbr.rel (0) target = $region45
    $region44: #{tpu_custom_call.1} parent=1 // pred_region
      %s327 = ssub.s32 256, 256
      %328 = vsyncadd [#allocation4], %s327
      %s329 = sshll.u32 [#allocation8], 4
      %s330 = int_to_ptr.vmem [resolvable:$true] %s329
      %335 = dma.vmem_to_hbm [thread:$0]  %s330, 256, %s7, [#allocation4], 128, 128, 8
    $region45: #{tpu_custom_call.1} parent=1 // pred_fallthru
      _
    // Predicated region
    $region46: #{tpu_custom_call.1} parent=1 // pred_check
      _
    $region47: #{tpu_custom_call.1} parent=1 // pred_check_branch
      %337 = sbr.rel (0) target = $region49
    $region48: #{tpu_custom_call.1} parent=1 // pred_region
      %338 = dma.done [#allocation4], 256
    $region49: #{tpu_custom_call.1} parent=1 // pred_fallthru
      _
    %339 = vsyncpa [#allocation3], 1
    %340 = vsyncpa [#allocation6], 1
    %341 = vsyncpa [#allocation4], 1

// kernel: tpu_custom_call.1
$region0: #{tpu_custom_call.1}
  #allocation0 [shape = 'u32[]', space=smem, size = 0x4, offset = 0x4, fixed_abs, tag = 'smem constant byte address 0x4 - core index']
  #allocation1 [shape = 'u32[144,128]{1,0:T(1,128)}', space=vmem, size = 0x12000, scoped, tag = 'internal scratch']
  %s0 = inlined_call_operand.hbm [shape: f32[16,128], index: 0, kind: input, shape index: {}]
  %s1 = inlined_call_operand.hbm [shape: f32[128,128], index: 1, kind: input, shape index: {}]
  %s2 = inlined_call_operand.vmem [shape: f32[1,128], index: 2, kind: input, shape index: {}]
  %s3 = inlined_call_operand.vmem [shape: f32[1,128], index: 3, kind: input, shape index: {}]
  %s4 = inlined_call_operand.vmem [shape: f32[1,128], index: 4, kind: input, shape index: {}]
  %s5 = inlined_call_operand.hbm [shape: f32[128,128], index: 5, kind: input, shape index: {}]
  %s6 = inlined_call_operand.vmem [shape: f32[1,128], index: 6, kind: input, shape index: {}]
  %s7 = inlined_call_operand.hbm [shape: f32[16,128], index: 7, kind: output, shape index: {}]
  %s8 = sld [smem:[#allocation0]]
  $region50: #{tpu_custom_call.1} parent=0
    _
  %s10 = ssub.s32 1, %s8
  %s11 = scalar_select 0, %s10, %s8
  $region1: #{tpu_custom_call.1} parent=0
    #allocation2 [shape = 'u8[8192]{0}', space=vmem, size = 0x2000, scoped, tag = 'input window, operand 0, single buffered']
    #allocation3 [shape = 's32[1]{0}', space=sflag, size = 0x4, scoped, tag = 'scoped memory for tpu_custom_call.1']
    #allocation4 [shape = 's32[1]{0}', space=sflag, size = 0x4, scoped, tag = 'scoped memory for tpu_custom_call.1']
    #allocation5 [shape = 'u8[65536]{0}', space=vmem, size = 0x10000, scoped, tag = 'input window, operand 1, single buffered']
    #allocation6 [shape = 's32[1]{0}', space=sflag, size = 0x4, scoped, tag = 'scoped memory for tpu_custom_call.1']
    #allocation7 [shape = 'u8[65536]{0}', space=vmem, size = 0x10000, scoped, tag = 'input window, operand 5, single buffered']
    #allocation8 [shape = 'u8[8192]{0}', space=vmem, size = 0x2000, scoped, tag = 'output window, operand 0, single buffered']
    %12 = vsyncpa [#allocation3], 0
    %13 = vsyncpa [#allocation6], 0
    %14 = vsyncpa [#allocation4], 0
    // Predicated region
    $region2: #{tpu_custom_call.1} parent=1 // pred_check
      _
    $region3: #{tpu_custom_call.1} parent=1 // pred_check_branch
      %16 = sbr.rel (0) target = $region5
    $region4: #{tpu_custom_call.1} parent=1 // pred_region
      %s18 = ssub.s32 256, 256
      %19 = vsyncadd [#allocation3], %s18
      %s20 = sshll.u32 [#allocation2], 4
      %s21 = int_to_ptr.vmem [resolvable:$true] %s20
      %26 = dma.hbm_to_vmem [thread:$0]  %s0, 256, %s21, [#allocation3], 128, 128, 8
    $region5: #{tpu_custom_call.1} parent=1 // pred_fallthru
      _
    // Predicated region
    $region6: #{tpu_custom_call.1} parent=1 // pred_check
      _
    $region7: #{tpu_custom_call.1} parent=1 // pred_check_branch
      %28 = sbr.rel (0) target = $region9
    $region8: #{tpu_custom_call.1} parent=1 // pred_region
      %s30 = ssub.s32 2048, 2048
      %31 = vsyncadd [#allocation6], %s30
      %s32 = sshll.u32 [#allocation5], 4
      %s33 = int_to_ptr.vmem [resolvable:$true] %s32
      %38 = dma.hbm_to_vmem [thread:$0]  %s1, 2048, %s33, [#allocation6], 128, 128, 8
    $region9: #{tpu_custom_call.1} parent=1 // pred_fallthru
      _
    // Predicated region
    $region10: #{tpu_custom_call.1} parent=1 // pred_check
      _
    $region11: #{tpu_custom_call.1} parent=1 // pred_check_branch
      %40 = sbr.rel (0) target = $region13
    $region12: #{tpu_custom_call.1} parent=1 // pred_region
      _
    $region13: #{tpu_custom_call.1} parent=1 // pred_fallthru
      _
    // Predicated region
    $region14: #{tpu_custom_call.1} parent=1 // pred_check
      _
    $region15: #{tpu_custom_call.1} parent=1 // pred_check_branch
      %42 = sbr.rel (0) target = $region17
    $region16: #{tpu_custom_call.1} parent=1 // pred_region
      _
    $region17: #{tpu_custom_call.1} parent=1 // pred_fallthru
      _
    // Predicated region
    $region18: #{tpu_custom_call.1} parent=1 // pred_check
      _
    $region19: #{tpu_custom_call.1} parent=1 // pred_check_branch
      %44 = sbr.rel (0) target = $region21
    $region20: #{tpu_custom_call.1} parent=1 // pred_region
      _
    $region21: #{tpu_custom_call.1} parent=1 // pred_fallthru
      _
    // Predicated region
    $region22: #{tpu_custom_call.1} parent=1 // pred_check
      _
    $region23: #{tpu_custom_call.1} parent=1 // pred_check_branch
      %46 = sbr.rel (0) target = $region25
    $region24: #{tpu_custom_call.1} parent=1 // pred_region
      %s48 = ssub.s32 2048, 2048
      %49 = vsyncadd [#allocation6], %s48
      %s50 = sshll.u32 [#allocation7], 4
      %s51 = int_to_ptr.vmem [resolvable:$true] %s50
      %56 = dma.hbm_to_vmem [thread:$0]  %s5, 2048, %s51, [#allocation6], 128, 128, 8
    $region25: #{tpu_custom_call.1} parent=1 // pred_fallthru
      _
    // Predicated region
    $region26: #{tpu_custom_call.1} parent=1 // pred_check
      _
    $region27: #{tpu_custom_call.1} parent=1 // pred_check_branch
      %58 = sbr.rel (0) target = $region29
    $region28: #{tpu_custom_call.1} parent=1 // pred_region
      _
    $region29: #{tpu_custom_call.1} parent=1 // pred_fallthru
      _
    // Predicated region
    $region30: #{tpu_custom_call.1} parent=1 // pred_check
      _
    $region31: #{tpu_custom_call.1} parent=1 // pred_check_branch
      %60 = sbr.rel (0) target = $region33
    $region32: #{tpu_custom_call.1} parent=1 // pred_region
      %61 = dma.done [#allocation3], 256
    $region33: #{tpu_custom_call.1} parent=1 // pred_fallthru
      _
    // Predicated region
    $region34: #{tpu_custom_call.1} parent=1 // pred_check
      _
    $region35: #{tpu_custom_call.1} parent=1 // pred_check_branch
      %63 = sbr.rel (0) target = $region37
    $region36: #{tpu_custom_call.1} parent=1 // pred_region
      %64 = dma.done [#allocation6], 2048
    $region37: #{tpu_custom_call.1} parent=1 // pred_fallthru
      _
    // Predicated region
    $region38: #{tpu_custom_call.1} parent=1 // pred_check
      _
    $region39: #{tpu_custom_call.1} parent=1 // pred_check_branch
      %66 = sbr.rel (0) target = $region41
    $region40: #{tpu_custom_call.1} parent=1 // pred_region
      %67 = dma.done [#allocation6], 2048
    $region41: #{tpu_custom_call.1} parent=1 // pred_fallthru
      _
    %v68 = vld [vmem:[#allocation5] sm:$0xff]
    %v69 = vld [vmem:[#allocation5 + $0x8] sm:$0xff]
    %v70 = vld [vmem:[#allocation5 + $0x10] sm:$0xff]
    %v71 = vld [vmem:[#allocation5 + $0x18] sm:$0xff]
    %v72 = vld [vmem:[#allocation5 + $0x20] sm:$0xff]
    %v73 = vld [vmem:[#allocation5 + $0x28] sm:$0xff]
    %v74 = vld [vmem:[#allocation5 + $0x30] sm:$0xff]
    %v75 = vld [vmem:[#allocation5 + $0x38] sm:$0xff]
    %v76 = vld [vmem:[#allocation5 + $0x40] sm:$0xff]
    %v77 = vld [vmem:[#allocation5 + $0x48] sm:$0xff]
    %v78 = vld [vmem:[#allocation5 + $0x50] sm:$0xff]
    %v79 = vld [vmem:[#allocation5 + $0x58] sm:$0xff]
    %v80 = vld [vmem:[#allocation5 + $0x60] sm:$0xff]
    %v81 = vld [vmem:[#allocation5 + $0x68] sm:$0xff]
    %v82 = vld [vmem:[#allocation5 + $0x70] sm:$0xff]
    %v83 = vld [vmem:[#allocation5 + $0x78] sm:$0xff]
    %v84 = vld [vmem:[#allocation7] sm:$0xff]
    %v85 = vld [vmem:[#allocation7 + $0x8] sm:$0xff]
    %v86 = vld [vmem:[#allocation7 + $0x10] sm:$0xff]
    %v87 = vld [vmem:[#allocation7 + $0x18] sm:$0xff]
    %v88 = vld [vmem:[#allocation7 + $0x20] sm:$0xff]
    %v89 = vld [vmem:[#allocation7 + $0x28] sm:$0xff]
    %v90 = vld [vmem:[#allocation7 + $0x30] sm:$0xff]
    %v91 = vld [vmem:[#allocation7 + $0x38] sm:$0xff]
    %v92 = vld [vmem:[#allocation7 + $0x40] sm:$0xff]
    %v93 = vld [vmem:[#allocation7 + $0x48] sm:$0xff]
    %v94 = vld [vmem:[#allocation7 + $0x50] sm:$0xff]
    %v95 = vld [vmem:[#allocation7 + $0x58] sm:$0xff]
    %v96 = vld [vmem:[#allocation7 + $0x60] sm:$0xff]
    %v97 = vld [vmem:[#allocation7 + $0x68] sm:$0xff]
    %v98 = vld [vmem:[#allocation7 + $0x70] sm:$0xff]
    %v99 = vld [vmem:[#allocation7 + $0x78] sm:$0xff]
    %v100 = vld [vmem:[%s2] sm:$0x1]
    %v101 = vld [vmem:[%s3] sm:$0x1]
    %v102 = vld [vmem:[%s4] sm:$0x1]
    %v103 = vld [vmem:[%s6] sm:$0x1]
    %v104 = vld [vmem:[#allocation2] sm:$0xff]
    %v105 = vld [vmem:[#allocation2 + $0x8] sm:$0xff]
    %v107 = vlaneseq
    %v108 = vshrl.u32 %v107, 7
    %v109 = vsub.s32 0, %v108
    %v110 = vrot.slane %v100, %v109
    %112 = vmatprep.subr.mxu0 0.0
    %113 = vmatpush1.msra.mxu0 %v68
    %114 = vmatprep.subr.mxu0 0.0
    %115 = vmatpush1.msra.mxu0 %v69
    %116 = vmatprep.subr.mxu0 0.0
    %117 = vmatpush1.msra.mxu0 %v70
    %118 = vmatprep.subr.mxu0 0.0
    %119 = vmatpush1.msra.mxu0 %v71
    %120 = vmatprep.subr.mxu0 0.0
    %121 = vmatpush1.msra.mxu0 %v72
    %122 = vmatprep.subr.mxu0 0.0
    %123 = vmatpush1.msra.mxu0 %v73
    %124 = vmatprep.subr.mxu0 0.0
    %125 = vmatpush1.msra.mxu0 %v74
    %126 = vmatprep.subr.mxu0 0.0
    %127 = vmatpush1.msra.mxu0 %v75
    %128 = vmatprep.subr.mxu0 0.0
    %129 = vmatpush1.msra.mxu0 %v76
    %130 = vmatprep.subr.mxu0 0.0
    %131 = vmatpush1.msra.mxu0 %v77
    %132 = vmatprep.subr.mxu0 0.0
    %133 = vmatpush1.msra.mxu0 %v78
    %134 = vmatprep.subr.mxu0 0.0
    %135 = vmatpush1.msra.mxu0 %v79
    %136 = vmatprep.subr.mxu0 0.0
    %137 = vmatpush1.msra.mxu0 %v80
    %138 = vmatprep.subr.mxu0 0.0
    %139 = vmatpush1.msra.mxu0 %v81
    %140 = vmatprep.subr.mxu0 0.0
    %141 = vmatpush1.msra.mxu0 %v82
    %142 = vmatprep.subr.mxu0 0.0
    %143 = vmatpush1.msra.mxu0 %v83
    %144 = vmatprep.subr.mxu0 0.0
    %145 = vmatpush1.msra.mxu0 0.0
    %146 = vmatprep.subr.mxu0 0.0
    %147 = vmatpush1.msra.mxu0 0.0
    %148 = vmatprep.subr.mxu0 0.0
    %149 = vmatpush1.msra.mxu0 0.0
    %150 = vmatprep.subr.mxu0 0.0
    %151 = vmatpush1.msra.mxu0 0.0
    %152 = vmatprep.subr.mxu0 0.0
    %153 = vmatpush1.msra.mxu0 0.0
    %154 = vmatprep.subr.mxu0 0.0
    %155 = vmatpush1.msra.mxu0 0.0
    %156 = vmatprep.subr.mxu0 0.0
    %157 = vmatpush1.msra.mxu0 0.0
    %158 = vmatprep.subr.mxu0 0.0
    %159 = vmatpush1.msra.mxu0 0.0
    %160 = vmatprep.subr.mxu0 0.0
    %161 = vmatpush1.msra.mxu0 0.0
    %162 = vmatprep.subr.mxu0 0.0
    %163 = vmatpush1.msra.mxu0 0.0
    %164 = vmatprep.subr.mxu0 0.0
    %165 = vmatpush1.msra.mxu0 0.0
    %166 = vmatprep.subr.mxu0 0.0
    %167 = vmatpush1.msra.mxu0 0.0
    %168 = vmatprep.subr.mxu0 0.0
    %169 = vmatpush1.msra.mxu0 0.0
    %170 = vmatprep.subr.mxu0 0.0
    %171 = vmatpush1.msra.mxu0 0.0
    %172 = vmatprep.subr.mxu0 0.0
    %173 = vmatpush1.msra.mxu0 0.0
    %174 = vmatprep.subr.mxu0 0.0
    %175 = vmatpush1.msra.mxu0 0.0
    %176 = vmatprep.mubr.f32.mxu0 0.0
    %177 = vmatmul.mubr.f32.gmra.mrb[0].mxu0 %v104
    %v178 = vpop.f32.mrb[0].mxu0
    %v179 = vadd.f32 %v110, %v178
    %v180 = vpop.f32.mrb[0].mxu0
    %181 = vmatprep.mubr.f32.mxu0 0.0
    %182 = vmatmul.mubr.f32.gmra.mrb[0].mxu0 %v105
    %v183 = vpop.f32.mrb[0].mxu0
    %v184 = vadd.f32 %v110, %v183
    %v185 = vpop.f32.mrb[0].mxu0
    %186 = vdwg.mxu0
    %v187 = vmul.f32 %v179, 0.5
    %v188 = vmul.f32 %v184, 0.5
    %v189 = vmul.f32 %v179, 0.70710677
    %v190 = vmul.f32 %v184, 0.70710677
    %v191 = verf.f32.pop %v189
    %v192 = verf.f32.pop %v190
    %v193 = vadd.f32 %v191, 1.0
    %v194 = vadd.f32 %v192, 1.0
    %v195 = vmul.f32 %v187, %v193
    %v196 = vmul.f32 %v188, %v194
    %197 = vadd.xlane.f32.xlu0 %v195
    %v198 = vpop.xlane.xlu0 %197
    %199 = vadd.xlane.f32.xlu0 %v196
    %v200 = vpop.xlane.xlu0 %199
    %v201 = vmul.f32 %v195, %v195
    %v202 = vmul.f32 %v196, %v196
    %203 = vadd.xlane.f32.xlu0 %v201
    %v204 = vpop.xlane.xlu0 %203
    %205 = vadd.xlane.f32.xlu0 %v202
    %v206 = vpop.xlane.xlu0 %205
    %v207 = vmul.f32 %v198, 0.03125
    %v208 = vmul.f32 %v200, 0.03125
    %v209 = vmul.f32 %v204, 0.03125
    %v210 = vmul.f32 %v206, 0.03125
    %v211 = vmul.f32 %v207, %v207
    %v212 = vmul.f32 %v208, %v208
    %v213 = vsub.f32 %v209, %v211
    %v214 = vsub.f32 %v210, %v212
    %v215 = vmax.f32 %v213, 0.0
    %v216 = vmax.f32 %v214, 0.0
    %v217 = vsub.f32 %v195, %v207
    %v218 = vsub.f32 %v196, %v208
    %v219 = vadd.f32 %v215, 1e-12
    %v220 = vadd.f32 %v216, 1e-12
    %v221 = vrsqrt.pop %v219
    %v222 = vrsqrt.pop %v220
    %v223 = vmul.f32 %v217, %v221
    %v224 = vmul.f32 %v218, %v222
    %v226 = vlaneseq
    %v227 = vshrl.u32 %v226, 7
    %v228 = vsub.s32 0, %v227
    %v229 = vrot.slane %v101, %v228
    %v231 = vmul.f32 %v223, %v229
    %v232 = vmul.f32 %v224, %v229
    %v234 = vlaneseq
    %v235 = vshrl.u32 %v234, 7
    %v236 = vsub.s32 0, %v235
    %v237 = vrot.slane %v102, %v236
    %v239 = vadd.f32 %v231, %v237
    %v240 = vadd.f32 %v232, %v237
    %v242 = vlaneseq
    %v243 = vshrl.u32 %v242, 7
    %v244 = vsub.s32 0, %v243
    %v245 = vrot.slane %v103, %v244
    %247 = vmatprep.subr.mxu0 0.0
    %248 = vmatpush1.msra.mxu0 %v84
    %249 = vmatprep.subr.mxu0 0.0
    %250 = vmatpush1.msra.mxu0 %v85
    %251 = vmatprep.subr.mxu0 0.0
    %252 = vmatpush1.msra.mxu0 %v86
    %253 = vmatprep.subr.mxu0 0.0
    %254 = vmatpush1.msra.mxu0 %v87
    %255 = vmatprep.subr.mxu0 0.0
    %256 = vmatpush1.msra.mxu0 %v88
    %257 = vmatprep.subr.mxu0 0.0
    %258 = vmatpush1.msra.mxu0 %v89
    %259 = vmatprep.subr.mxu0 0.0
    %260 = vmatpush1.msra.mxu0 %v90
    %261 = vmatprep.subr.mxu0 0.0
    %262 = vmatpush1.msra.mxu0 %v91
    %263 = vmatprep.subr.mxu0 0.0
    %264 = vmatpush1.msra.mxu0 %v92
    %265 = vmatprep.subr.mxu0 0.0
    %266 = vmatpush1.msra.mxu0 %v93
    %267 = vmatprep.subr.mxu0 0.0
    %268 = vmatpush1.msra.mxu0 %v94
    %269 = vmatprep.subr.mxu0 0.0
    %270 = vmatpush1.msra.mxu0 %v95
    %271 = vmatprep.subr.mxu0 0.0
    %272 = vmatpush1.msra.mxu0 %v96
    %273 = vmatprep.subr.mxu0 0.0
    %274 = vmatpush1.msra.mxu0 %v97
    %275 = vmatprep.subr.mxu0 0.0
    %276 = vmatpush1.msra.mxu0 %v98
    %277 = vmatprep.subr.mxu0 0.0
    %278 = vmatpush1.msra.mxu0 %v99
    %279 = vmatprep.subr.mxu0 0.0
    %280 = vmatpush1.msra.mxu0 0.0
    %281 = vmatprep.subr.mxu0 0.0
    %282 = vmatpush1.msra.mxu0 0.0
    %283 = vmatprep.subr.mxu0 0.0
    %284 = vmatpush1.msra.mxu0 0.0
    %285 = vmatprep.subr.mxu0 0.0
    %286 = vmatpush1.msra.mxu0 0.0
    %287 = vmatprep.subr.mxu0 0.0
    %288 = vmatpush1.msra.mxu0 0.0
    %289 = vmatprep.subr.mxu0 0.0
    %290 = vmatpush1.msra.mxu0 0.0
    %291 = vmatprep.subr.mxu0 0.0
    %292 = vmatpush1.msra.mxu0 0.0
    %293 = vmatprep.subr.mxu0 0.0
    %294 = vmatpush1.msra.mxu0 0.0
    %295 = vmatprep.subr.mxu0 0.0
    %296 = vmatpush1.msra.mxu0 0.0
    %297 = vmatprep.subr.mxu0 0.0
    %298 = vmatpush1.msra.mxu0 0.0
    %299 = vmatprep.subr.mxu0 0.0
    %300 = vmatpush1.msra.mxu0 0.0
    %301 = vmatprep.subr.mxu0 0.0
    %302 = vmatpush1.msra.mxu0 0.0
    %303 = vmatprep.subr.mxu0 0.0
    %304 = vmatpush1.msra.mxu0 0.0
    %305 = vmatprep.subr.mxu0 0.0
    %306 = vmatpush1.msra.mxu0 0.0
    %307 = vmatprep.subr.mxu0 0.0
    %308 = vmatpush1.msra.mxu0 0.0
    %309 = vmatprep.subr.mxu0 0.0
    %310 = vmatpush1.msra.mxu0 0.0
    %311 = vmatprep.mubr.f32.mxu0 0.0
    %312 = vmatmul.mubr.f32.gmra.mrb[0].mxu0 %v239
    %v313 = vpop.f32.mrb[0].mxu0
    %v314 = vadd.f32 %v245, %v313
    %v315 = vpop.f32.mrb[0].mxu0
    %316 = vmatprep.mubr.f32.mxu0 0.0
    %317 = vmatmul.mubr.f32.gmra.mrb[0].mxu0 %v240
    %v318 = vpop.f32.mrb[0].mxu0
    %v319 = vadd.f32 %v245, %v318
    %v320 = vpop.f32.mrb[0].mxu0
    %321 = vdwg.mxu0
    %322 = vst [vmem:[#allocation8] sm:$0xff] %v314
    %323 = vst [vmem:[#allocation8 + $0x8] sm:$0xff] %v319
    // Predicated region
    $region42: #{tpu_custom_call.1} parent=1 // pred_check
      _
    $region43: #{tpu_custom_call.1} parent=1 // pred_check_branch
      %325 = sbr.rel (0) target = $region45
    $region44: #{tpu_custom_call.1} parent=1 // pred_region
      %s327 = ssub.s32 256, 256
      %328 = vsyncadd [#allocation4], %s327
      %s329 = sshll.u32 [#allocation8], 4
      %s330 = int_to_ptr.vmem [resolvable:$true] %s329
      %335 = dma.vmem_to_hbm [thread:$0]  %s330, 256, %s7, [#allocation4], 128, 128, 8
    $region45: #{tpu_custom_call.1} parent=1 // pred_fallthru
      _
    // Predicated region
    $region46: #{tpu_custom_call.1} parent=1 // pred_check
      _
    $region47: #{tpu_custom_call.1} parent=1 // pred_check_branch
      %337 = sbr.rel (0) target = $region49
    $region48: #{tpu_custom_call.1} parent=1 // pred_region
      %338 = dma.done [#allocation4], 256
    $region49: #{tpu_custom_call.1} parent=1 // pred_fallthru
      _
    %339 = vsyncpa [#allocation3], 1
    %340 = vsyncpa [#allocation6], 1
    %341 = vsyncpa [#allocation4], 1

</llo_original>
